<compile_context>
chip_gen: v7x
topology: tpu7x:2x2x1
jax: 0.10.0
libtpu: 0.0.40
codegen_flags: <defaults>
</compile_context>

<pallas_src>
import functools

import jax
import jax.numpy as jnp
from jax.experimental import pallas as pl
from jax.experimental.pallas import tpu as pltpu

NUM_CLASSES = 7
EPSILON = 1e-07
_LANE = 128


def _f1_sums_kernel(yt_ref, yp_ref, tp_ref, sp_ref, cnt_ref, *,
                    n, tn, tiles_per_split):
    """Accumulate per-class tp = sum(onehot*softmax), sp = sum(softmax)
    (== tp+fp) and cnt = sum(onehot) (== tp+fn) for this split's batch slice."""
    s = pl.program_id(0)          # core/split index ("parallel")
    t = pl.program_id(1)          # tile index within the split ("arbitrary")

    @pl.when(t == 0)
    def _init():
        tp_ref[...] = jnp.zeros_like(tp_ref)
        sp_ref[...] = jnp.zeros_like(sp_ref)
        cnt_ref[...] = jnp.zeros_like(cnt_ref)

    g = s * tiles_per_split + t   # global (unclamped) tile index
    base = g * tn                 # first global column covered by this tile

    logits = yp_ref[...].astype(jnp.float32)   # [C, TN]
    labels = yt_ref[...].astype(jnp.int32)     # [1, TN]

    def accumulate(valid):
        # `valid is None` -> mask-free fast path for fully in-bounds tiles.
        x = logits if valid is None else jnp.where(valid, logits, 0.0)
        class_ids = jax.lax.broadcasted_iota(jnp.int32, x.shape, 0)   # [C, TN]
        hit = labels == class_ids                                     # [C, TN]
        if valid is not None:
            hit = jnp.logical_and(hit, valid)
        onehot = hit.astype(jnp.float32)

        # Numerically stable softmax over the class (sublane) axis.
        m = jnp.max(x, axis=0, keepdims=True)                         # [1, TN]
        e = jnp.exp(x - m)                                            # [C, TN]
        denom = jnp.sum(e, axis=0, keepdims=True)                     # [1, TN]
        inv = pl.reciprocal(denom, approx=True)                       # EUP slot
        inv = inv * (2.0 - denom * inv)                               # Newton -> ~f32
        p = e * inv                                                   # [C, TN]
        if valid is not None:
            p = jnp.where(valid, p, 0.0)

        tp_ref[0] += jnp.sum(onehot * p, axis=1, keepdims=True)       # [C, 1]
        sp_ref[0] += jnp.sum(p, axis=1, keepdims=True)                # [C, 1]
        cnt_ref[0] += jnp.sum(onehot, axis=1, keepdims=True)          # [C, 1]

    is_full = (g + 1) * tn <= n

    @pl.when(is_full)
    def _full_tile():
        accumulate(None)

    @pl.when(jnp.logical_not(is_full))
    def _ragged_tile():
        col = base + jax.lax.broadcasted_iota(jnp.int32, logits.shape, 1)
        accumulate(col < n)


def f1_loss_from_cn(logits_cn, labels, *, epsilon=EPSILON, tile_n=131072,
                    num_splits=2):
    """F1 loss from class-major logits (the zero-extra-copy fast path).

    logits_cn: [7, N] float32/bfloat16 logits (class-major / lane-dense).
    labels:    [N] integer class indices (int8 is enough and cheapest).
    """
    c, n = logits_cn.shape
    assert c == NUM_CLASSES
    assert labels.ndim == 1 and labels.shape[0] == n
    assert jnp.issubdtype(labels.dtype, jnp.integer)
    assert n >= 1

    labels_2d = labels.reshape(1, n)

    # Tile width on the batch (lane) axis: big blocks (~2-4 MiB) for HBM
    # roofline, capped so each split gets work; lane-legal in all cases.
    tn = min(tile_n, pl.cdiv(n, max(1, num_splits)))
    tn = ((tn + _LANE - 1) // _LANE) * _LANE
    if tn >= n:
        tn = n                      # single (possibly ragged-free) full-extent block
    total_tiles = pl.cdiv(n, tn)

    # Leading "parallel" axis: v7x streams half the batch on each TensorCore;
    # harmless (sequential) on single-core v5e/v6e.
    s_splits = max(1, min(num_splits, total_tiles))
    tiles_per_split = pl.cdiv(total_tiles, s_splits)

    def _col_block(s, t):
        # Clamp so the DMA never targets a fully out-of-range block; the kernel
        # masks the (few) duplicated/ragged columns via the global column index.
        return jnp.minimum(s * tiles_per_split + t, total_tiles - 1)

    kernel = functools.partial(_f1_sums_kernel, n=n, tn=tn,
                               tiles_per_split=tiles_per_split)

    part_shape = jax.ShapeDtypeStruct((s_splits, c, 1), jnp.float32)
    part_spec = pl.BlockSpec((1, c, 1), lambda s, t: (s, 0, 0))

    bytes_accessed = (n * c * logits_cn.dtype.itemsize
                      + n * labels.dtype.itemsize
                      + 3 * s_splits * c * 4)
    cost = pl.CostEstimate(flops=12 * n * c, transcendentals=n * c,
                           bytes_accessed=int(bytes_accessed))

    tp_p, sp_p, cnt_p = pl.pallas_call(
        kernel,
        out_shape=(part_shape, part_shape, part_shape),
        grid_spec=pltpu.PrefetchScalarGridSpec(
            num_scalar_prefetch=0,
            grid=(s_splits, tiles_per_split),
            in_specs=[
                pl.BlockSpec((1, tn), lambda s, t: (0, _col_block(s, t))),   # labels
                pl.BlockSpec((c, tn), lambda s, t: (0, _col_block(s, t))),   # logits
            ],
            out_specs=[part_spec, part_spec, part_spec],
        ),
        compiler_params=pltpu.CompilerParams(
            dimension_semantics=("parallel", "arbitrary")),
        cost_estimate=cost,
    )(labels_2d, logits_cn)

    # Tiny 7-class F1 epilogue in plain JAX (partial sums combine; partial F1s don't).
    tp = jnp.sum(tp_p, axis=0)[:, 0]
    sp = jnp.sum(sp_p, axis=0)[:, 0]      # tp + fp
    cnt = jnp.sum(cnt_p, axis=0)[:, 0]    # tp + fn
    precision = tp / (sp + epsilon)
    recall = tp / (cnt + epsilon)
    f1 = 2.0 * (precision * recall) / (precision + recall + epsilon)
    f1 = jnp.clip(f1, epsilon, 1.0 - epsilon)
    return 1.0 - jnp.mean(f1)


def f1_loss(y_pred, y_true, **kwargs):
    """PyTorch-contract entry point: y_pred [N, 7] logits, y_true [N] ints.

    The transpose below is the one HBM copy this contract forces; producers
    that can emit [7, N] logits directly should call f1_loss_from_cn instead.
    """
    assert y_pred.ndim == 2
    assert y_true.ndim == 1
    assert y_pred.shape[1] == NUM_CLASSES
    return f1_loss_from_cn(jnp.transpose(y_pred), y_true, **kwargs)


def _f1_loss_ref(y_pred, y_true, epsilon=EPSILON):
    """Pure-JAX reference mirroring the PyTorch module."""
    onehot = jax.nn.one_hot(y_true, NUM_CLASSES, dtype=jnp.float32)
    p = jax.nn.softmax(y_pred.astype(jnp.float32), axis=1)
    tp = jnp.sum(onehot * p, axis=0)
    fp = jnp.sum((1.0 - onehot) * p, axis=0)
    fn = jnp.sum(onehot * (1.0 - p), axis=0)
    precision = tp / (tp + fp + epsilon)
    recall = tp / (tp + fn + epsilon)
    f1 = 2.0 * (precision * recall) / (precision + recall + epsilon)
    f1 = jnp.clip(f1, epsilon, 1.0 - epsilon)
    return 1.0 - jnp.mean(f1)


if __name__ == "__main__":
    key = jax.random.PRNGKey(0)
    k1, k2, k3, k4 = jax.random.split(key, 4)

    # Case 1: small single-block batch, f32 logits, int32 labels.
    n1 = 8
    yp1 = jax.random.normal(k1, (n1, NUM_CLASSES), dtype=jnp.float32)
    yt1 = jax.random.randint(k2, (n1,), 0, NUM_CLASSES, dtype=jnp.int32)
    out1 = jax.block_until_ready(jax.jit(f1_loss)(yp1, yt1))
    ref1 = jax.block_until_ready(_f1_loss_ref(yp1, yt1))
    assert jnp.allclose(out1, ref1, atol=1e-5, rtol=1e-5), (out1, ref1)

    # Case 2: multi-tile + ragged tail + 2-way core split, bf16 logits and
    # int8 labels (exercises masked-tail, duplicate-block and narrow dtypes).
    n2 = 300
    yp2 = jax.random.normal(k3, (n2, NUM_CLASSES),
                            dtype=jnp.float32).astype(jnp.bfloat16)
    yt2 = jax.random.randint(k4, (n2,), 0, NUM_CLASSES,
                             dtype=jnp.int32).astype(jnp.int8)
    f2 = jax.jit(functools.partial(f1_loss, tile_n=128, num_splits=2))
    out2 = jax.block_until_ready(f2(yp2, yt2))
    ref2 = jax.block_until_ready(_f1_loss_ref(yp2, yt2))
    assert jnp.allclose(out2, ref2, atol=1e-5, rtol=1e-5), (out2, ref2)

    print("KERNEL_OK")
</pallas_src>

<mosaic_0001>
module attributes {stable_mosaic.version = 11 : i64} {
  func.func @_f1_sums_kernel(%arg0: i32, %arg1: i32, %arg2: memref<1x8xi32, #tpu.memory_space<vmem>>, %arg3: memref<7x8xf32, #tpu.memory_space<vmem>>, %arg4: memref<1x7x1xf32, #tpu.memory_space<vmem>>, %arg5: memref<1x7x1xf32, #tpu.memory_space<vmem>>, %arg6: memref<1x7x1xf32, #tpu.memory_space<vmem>>) attributes {dimension_semantics = [#tpu.dimension_semantics<parallel>, #tpu.dimension_semantics<arbitrary>], iteration_bounds = array<i64: 1, 1>, scalar_prefetch = 0 : i64, scratch_operands = 0 : i64, tpu.core_type = #tpu.core_type<tc>, window_params = [{transform_indices = @transform_0, window_bounds = array<i64: 1, 8>}, {transform_indices = @transform_1, window_bounds = array<i64: 7, 8>}, {transform_indices = @transform_2, window_bounds = array<i64: 1, 7, 1>}, {transform_indices = @transform_3, window_bounds = array<i64: 1, 7, 1>}, {transform_indices = @transform_4, window_bounds = array<i64: 1, 7, 1>}]} {
    %c0_i32 = arith.constant 0 : i32
    %0 = arith.cmpi eq, %arg1, %c0_i32 : i32
    %1 = arith.extui %0 : i1 to i32
    %c0_i32_0 = arith.constant 0 : i32
    %2 = arith.cmpi ne, %1, %c0_i32_0 : i32
    scf.if %2 {
      %cst = arith.constant 0.000000e+00 : f32
      %16 = vector.broadcast %cst : f32 to vector<1x7x1xf32>
      %c0_9 = arith.constant 0 : index
      %c0_10 = arith.constant 0 : index
      %c0_11 = arith.constant 0 : index
      %17 = vector.load %arg4[%c0_9, %c0_10, %c0_11] : memref<1x7x1xf32, #tpu.memory_space<vmem>>, vector<1x7x1xf32>
      tpu.vector_store %arg4[%c0_9, %c0_10, %c0_11], %16 {strides = array<i32>} : memref<1x7x1xf32, #tpu.memory_space<vmem>>, vector<1x7x1xf32>,
      %cst_12 = arith.constant 0.000000e+00 : f32
      %18 = vector.broadcast %cst_12 : f32 to vector<1x7x1xf32>
      %c0_13 = arith.constant 0 : index
      %c0_14 = arith.constant 0 : index
      %c0_15 = arith.constant 0 : index
      %19 = vector.load %arg5[%c0_13, %c0_14, %c0_15] : memref<1x7x1xf32, #tpu.memory_space<vmem>>, vector<1x7x1xf32>
      tpu.vector_store %arg5[%c0_13, %c0_14, %c0_15], %18 {strides = array<i32>} : memref<1x7x1xf32, #tpu.memory_space<vmem>>, vector<1x7x1xf32>,
      %cst_16 = arith.constant 0.000000e+00 : f32
      %20 = vector.broadcast %cst_16 : f32 to vector<1x7x1xf32>
      %c0_17 = arith.constant 0 : index
      %c0_18 = arith.constant 0 : index
      %c0_19 = arith.constant 0 : index
      %21 = vector.load %arg6[%c0_17, %c0_18, %c0_19] : memref<1x7x1xf32, #tpu.memory_space<vmem>>, vector<1x7x1xf32>
      tpu.vector_store %arg6[%c0_17, %c0_18, %c0_19], %20 {strides = array<i32>} : memref<1x7x1xf32, #tpu.memory_space<vmem>>, vector<1x7x1xf32>,
    } else {
    }
    %c1_i32 = arith.constant 1 : i32
    %3 = arith.muli %arg0, %c1_i32 : i32
    %4 = arith.addi %3, %arg1 : i32
    %c8_i32 = arith.constant 8 : i32
    %5 = arith.muli %4, %c8_i32 : i32
    %c0 = arith.constant 0 : index
    %c0_1 = arith.constant 0 : index
    %6 = vector.load %arg3[%c0, %c0_1] : memref<7x8xf32, #tpu.memory_space<vmem>>, vector<7x8xf32>
    %c0_2 = arith.constant 0 : index
    %c0_3 = arith.constant 0 : index
    %7 = vector.load %arg2[%c0_2, %c0_3] : memref<1x8xi32, #tpu.memory_space<vmem>>, vector<1x8xi32>
    %c1_i32_4 = arith.constant 1 : i32
    %8 = arith.addi %4, %c1_i32_4 : i32
    %c8_i32_5 = arith.constant 8 : i32
    %9 = arith.muli %8, %c8_i32_5 : i32
    %c8_i32_6 = arith.constant 8 : i32
    %10 = arith.cmpi sle, %9, %c8_i32_6 : i32
    %11 = arith.extui %10 : i1 to i32
    %c0_i32_7 = arith.constant 0 : i32
    %12 = arith.cmpi ne, %11, %c0_i32_7 : i32
    scf.if %12 {
      %16 = tpu.iota {dimensions = array<i32: 0>} : vector<7x8xi32>
      %17 = vector.broadcast %7 : vector<1x8xi32> to vector<7x8xi32>
      %18 = arith.cmpi eq, %17, %16 : vector<7x8xi32>
      %19 = arith.extui %18 : vector<7x8xi1> to vector<7x8xi32>
      %20 = arith.sitofp %19 : vector<7x8xi32> to vector<7x8xf32>
      %cst = arith.constant dense<0xFF800000> : vector<8xf32>
      %21 = vector.multi_reduction <maximumf>, %6, %cst [0] : vector<7x8xf32> to vector<8xf32>
      %22 = vector.shape_cast %21 : vector<8xf32> to vector<1x8xf32>
      %23 = vector.broadcast %22 : vector<1x8xf32> to vector<7x8xf32>
      %24 = arith.subf %6, %23 : vector<7x8xf32>
      %25 = math.exp %24 : vector<7x8xf32>
      %cst_9 = arith.constant dense<0.000000e+00> : vector<8xf32>
      %26 = vector.multi_reduction <add>, %25, %cst_9 [0] : vector<7x8xf32> to vector<8xf32>
      %27 = vector.shape_cast %26 : vector<8xf32> to vector<1x8xf32>
      %28 = tpu.reciprocal %27 {approx = true} : vector<1x8xf32> -> vector<1x8xf32>
      %29 = arith.mulf %27, %28 : vector<1x8xf32>
      %cst_10 = arith.constant 2.000000e+00 : f32
      %30 = vector.broadcast %cst_10 : f32 to vector<1x8xf32>
      %31 = arith.subf %30, %29 : vector<1x8xf32>
      %32 = arith.mulf %28, %31 : vector<1x8xf32>
      %33 = vector.broadcast %32 : vector<1x8xf32> to vector<7x8xf32>
      %34 = arith.mulf %25, %33 : vector<7x8xf32>
      %c0_11 = arith.constant 0 : index
      %c0_12 = arith.constant 0 : index
      %c0_13 = arith.constant 0 : index
      %35 = vector.load %arg4[%c0_11, %c0_12, %c0_13] : memref<1x7x1xf32, #tpu.memory_space<vmem>>, vector<1x7x1xf32>
      %36 = vector.shape_cast %35 : vector<1x7x1xf32> to vector<7x1xf32>
      %37 = arith.mulf %20, %34 : vector<7x8xf32>
      %cst_14 = arith.constant dense<0.000000e+00> : vector<7xf32>
      %38 = vector.multi_reduction <add>, %37, %cst_14 [1] : vector<7x8xf32> to vector<7xf32>
      %39 = vector.shape_cast %38 : vector<7xf32> to vector<7x1xf32>
      %40 = arith.addf %36, %39 : vector<7x1xf32>
      %c0_15 = arith.constant 0 : index
      %c0_16 = arith.constant 0 : index
      %c0_17 = arith.constant 0 : index
      %41 = vector.load %arg4[%c0_15, %c0_16, %c0_17] : memref<1x7x1xf32, #tpu.memory_space<vmem>>, vector<1x7x1xf32>
      %42 = vector.shape_cast %41 : vector<1x7x1xf32> to vector<7x1xf32>
      %43 = vector.shape_cast %40 : vector<7x1xf32> to vector<1x7x1xf32>
      tpu.vector_store %arg4[%c0_15, %c0_16, %c0_17], %43 {strides = array<i32>} : memref<1x7x1xf32, #tpu.memory_space<vmem>>, vector<1x7x1xf32>,
      %c0_18 = arith.constant 0 : index
      %c0_19 = arith.constant 0 : index
      %c0_20 = arith.constant 0 : index
      %44 = vector.load %arg5[%c0_18, %c0_19, %c0_20] : memref<1x7x1xf32, #tpu.memory_space<vmem>>, vector<1x7x1xf32>
      %45 = vector.shape_cast %44 : vector<1x7x1xf32> to vector<7x1xf32>
      %cst_21 = arith.constant dense<0.000000e+00> : vector<7xf32>
      %46 = vector.multi_reduction <add>, %34, %cst_21 [1] : vector<7x8xf32> to vector<7xf32>
      %47 = vector.shape_cast %46 : vector<7xf32> to vector<7x1xf32>
      %48 = arith.addf %45, %47 : vector<7x1xf32>
      %c0_22 = arith.constant 0 : index
      %c0_23 = arith.constant 0 : index
      %c0_24 = arith.constant 0 : index
      %49 = vector.load %arg5[%c0_22, %c0_23, %c0_24] : memref<1x7x1xf32, #tpu.memory_space<vmem>>, vector<1x7x1xf32>
      %50 = vector.shape_cast %49 : vector<1x7x1xf32> to vector<7x1xf32>
      %51 = vector.shape_cast %48 : vector<7x1xf32> to vector<1x7x1xf32>
      tpu.vector_store %arg5[%c0_22, %c0_23, %c0_24], %51 {strides = array<i32>} : memref<1x7x1xf32, #tpu.memory_space<vmem>>, vector<1x7x1xf32>,
      %c0_25 = arith.constant 0 : index
      %c0_26 = arith.constant 0 : index
      %c0_27 = arith.constant 0 : index
      %52 = vector.load %arg6[%c0_25, %c0_26, %c0_27] : memref<1x7x1xf32, #tpu.memory_space<vmem>>, vector<1x7x1xf32>
      %53 = vector.shape_cast %52 : vector<1x7x1xf32> to vector<7x1xf32>
      %cst_28 = arith.constant dense<0.000000e+00> : vector<7xf32>
      %54 = vector.multi_reduction <add>, %20, %cst_28 [1] : vector<7x8xf32> to vector<7xf32>
      %55 = vector.shape_cast %54 : vector<7xf32> to vector<7x1xf32>
      %56 = arith.addf %53, %55 : vector<7x1xf32>
      %c0_29 = arith.constant 0 : index
      %c0_30 = arith.constant 0 : index
      %c0_31 = arith.constant 0 : index
      %57 = vector.load %arg6[%c0_29, %c0_30, %c0_31] : memref<1x7x1xf32, #tpu.memory_space<vmem>>, vector<1x7x1xf32>
      %58 = vector.shape_cast %57 : vector<1x7x1xf32> to vector<7x1xf32>
      %59 = vector.shape_cast %56 : vector<7x1xf32> to vector<1x7x1xf32>
      tpu.vector_store %arg6[%c0_29, %c0_30, %c0_31], %59 {strides = array<i32>} : memref<1x7x1xf32, #tpu.memory_space<vmem>>, vector<1x7x1xf32>,
    } else {
    }
    %true = arith.constant true
    %13 = arith.xori %10, %true : i1
    %14 = arith.extui %13 : i1 to i32
    %c0_i32_8 = arith.constant 0 : i32
    %15 = arith.cmpi ne, %14, %c0_i32_8 : i32
    scf.if %15 {
      %16 = tpu.iota {dimensions = array<i32: 1>} : vector<7x8xi32>
      %17 = vector.broadcast %5 : i32 to vector<7x8xi32>
      %18 = arith.addi %17, %16 : vector<7x8xi32>
      %c8_i32_9 = arith.constant 8 : i32
      %19 = vector.broadcast %c8_i32_9 : i32 to vector<7x8xi32>
      %20 = arith.cmpi slt, %18, %19 : vector<7x8xi32>
      %cst = arith.constant 0.000000e+00 : f32
      %21 = vector.broadcast %cst : f32 to vector<7x8xf32>
      %22 = arith.select %20, %6, %21 : vector<7x8xi1>, vector<7x8xf32>
      %23 = tpu.iota {dimensions = array<i32: 0>} : vector<7x8xi32>
      %24 = vector.broadcast %7 : vector<1x8xi32> to vector<7x8xi32>
      %25 = arith.cmpi eq, %24, %23 : vector<7x8xi32>
      %26 = arith.andi %25, %20 : vector<7x8xi1>
      %27 = arith.extui %26 : vector<7x8xi1> to vector<7x8xi32>
      %28 = arith.sitofp %27 : vector<7x8xi32> to vector<7x8xf32>
      %cst_10 = arith.constant dense<0xFF800000> : vector<8xf32>
      %29 = vector.multi_reduction <maximumf>, %22, %cst_10 [0] : vector<7x8xf32> to vector<8xf32>
      %30 = vector.shape_cast %29 : vector<8xf32> to vector<1x8xf32>
      %31 = vector.broadcast %30 : vector<1x8xf32> to vector<7x8xf32>
      %32 = arith.subf %22, %31 : vector<7x8xf32>
      %33 = math.exp %32 : vector<7x8xf32>
      %cst_11 = arith.constant dense<0.000000e+00> : vector<8xf32>
      %34 = vector.multi_reduction <add>, %33, %cst_11 [0] : vector<7x8xf32> to vector<8xf32>
      %35 = vector.shape_cast %34 : vector<8xf32> to vector<1x8xf32>
      %36 = tpu.reciprocal %35 {approx = true} : vector<1x8xf32> -> vector<1x8xf32>
      %37 = arith.mulf %35, %36 : vector<1x8xf32>
      %cst_12 = arith.constant 2.000000e+00 : f32
      %38 = vector.broadcast %cst_12 : f32 to vector<1x8xf32>
      %39 = arith.subf %38, %37 : vector<1x8xf32>
      %40 = arith.mulf %36, %39 : vector<1x8xf32>
      %41 = vector.broadcast %40 : vector<1x8xf32> to vector<7x8xf32>
      %42 = arith.mulf %33, %41 : vector<7x8xf32>
      %cst_13 = arith.constant 0.000000e+00 : f32
      %43 = vector.broadcast %cst_13 : f32 to vector<7x8xf32>
      %44 = arith.select %20, %42, %43 : vector<7x8xi1>, vector<7x8xf32>
      %c0_14 = arith.constant 0 : index
      %c0_15 = arith.constant 0 : index
      %c0_16 = arith.constant 0 : index
      %45 = vector.load %arg4[%c0_14, %c0_15, %c0_16] : memref<1x7x1xf32, #tpu.memory_space<vmem>>, vector<1x7x1xf32>
      %46 = vector.shape_cast %45 : vector<1x7x1xf32> to vector<7x1xf32>
      %47 = arith.mulf %28, %44 : vector<7x8xf32>
      %cst_17 = arith.constant dense<0.000000e+00> : vector<7xf32>
      %48 = vector.multi_reduction <add>, %47, %cst_17 [1] : vector<7x8xf32> to vector<7xf32>
      %49 = vector.shape_cast %48 : vector<7xf32> to vector<7x1xf32>
      %50 = arith.addf %46, %49 : vector<7x1xf32>
      %c0_18 = arith.constant 0 : index
      %c0_19 = arith.constant 0 : index
      %c0_20 = arith.constant 0 : index
      %51 = vector.load %arg4[%c0_18, %c0_19, %c0_20] : memref<1x7x1xf32, #tpu.memory_space<vmem>>, vector<1x7x1xf32>
      %52 = vector.shape_cast %51 : vector<1x7x1xf32> to vector<7x1xf32>
      %53 = vector.shape_cast %50 : vector<7x1xf32> to vector<1x7x1xf32>
      tpu.vector_store %arg4[%c0_18, %c0_19, %c0_20], %53 {strides = array<i32>} : memref<1x7x1xf32, #tpu.memory_space<vmem>>, vector<1x7x1xf32>,
      %c0_21 = arith.constant 0 : index
      %c0_22 = arith.constant 0 : index
      %c0_23 = arith.constant 0 : index
      %54 = vector.load %arg5[%c0_21, %c0_22, %c0_23] : memref<1x7x1xf32, #tpu.memory_space<vmem>>, vector<1x7x1xf32>
      %55 = vector.shape_cast %54 : vector<1x7x1xf32> to vector<7x1xf32>
      %cst_24 = arith.constant dense<0.000000e+00> : vector<7xf32>
      %56 = vector.multi_reduction <add>, %44, %cst_24 [1] : vector<7x8xf32> to vector<7xf32>
      %57 = vector.shape_cast %56 : vector<7xf32> to vector<7x1xf32>
      %58 = arith.addf %55, %57 : vector<7x1xf32>
      %c0_25 = arith.constant 0 : index
      %c0_26 = arith.constant 0 : index
      %c0_27 = arith.constant 0 : index
      %59 = vector.load %arg5[%c0_25, %c0_26, %c0_27] : memref<1x7x1xf32, #tpu.memory_space<vmem>>, vector<1x7x1xf32>
      %60 = vector.shape_cast %59 : vector<1x7x1xf32> to vector<7x1xf32>
      %61 = vector.shape_cast %58 : vector<7x1xf32> to vector<1x7x1xf32>
      tpu.vector_store %arg5[%c0_25, %c0_26, %c0_27], %61 {strides = array<i32>} : memref<1x7x1xf32, #tpu.memory_space<vmem>>, vector<1x7x1xf32>,
      %c0_28 = arith.constant 0 : index
      %c0_29 = arith.constant 0 : index
      %c0_30 = arith.constant 0 : index
      %62 = vector.load %arg6[%c0_28, %c0_29, %c0_30] : memref<1x7x1xf32, #tpu.memory_space<vmem>>, vector<1x7x1xf32>
      %63 = vector.shape_cast %62 : vector<1x7x1xf32> to vector<7x1xf32>
      %cst_31 = arith.constant dense<0.000000e+00> : vector<7xf32>
      %64 = vector.multi_reduction <add>, %28, %cst_31 [1] : vector<7x8xf32> to vector<7xf32>
      %65 = vector.shape_cast %64 : vector<7xf32> to vector<7x1xf32>
      %66 = arith.addf %63, %65 : vector<7x1xf32>
      %c0_32 = arith.constant 0 : index
      %c0_33 = arith.constant 0 : index
      %c0_34 = arith.constant 0 : index
      %67 = vector.load %arg6[%c0_32, %c0_33, %c0_34] : memref<1x7x1xf32, #tpu.memory_space<vmem>>, vector<1x7x1xf32>
      %68 = vector.shape_cast %67 : vector<1x7x1xf32> to vector<7x1xf32>
      %69 = vector.shape_cast %66 : vector<7x1xf32> to vector<1x7x1xf32>
      tpu.vector_store %arg6[%c0_32, %c0_33, %c0_34], %69 {strides = array<i32>} : memref<1x7x1xf32, #tpu.memory_space<vmem>>, vector<1x7x1xf32>,
    } else {
    }
    return
  }
  func.func @transform_0(%arg0: i32, %arg1: i32) -> (i32, i32) {
    %c1_i32 = arith.constant 1 : i32
    %0 = arith.muli %arg0, %c1_i32 : i32
    %1 = arith.addi %0, %arg1 : i32
    %c0_i32 = arith.constant 0 : i32
    %2 = arith.minsi %1, %c0_i32 : i32
    %c0_i32_0 = arith.constant 0 : i32
    %c0_i32_1 = arith.constant 0 : i32
    return %c0_i32_0, %2 : i32, i32
  }
  func.func @transform_1(%arg0: i32, %arg1: i32) -> (i32, i32) {
    %c1_i32 = arith.constant 1 : i32
    %0 = arith.muli %arg0, %c1_i32 : i32
    %1 = arith.addi %0, %arg1 : i32
    %c0_i32 = arith.constant 0 : i32
    %2 = arith.minsi %1, %c0_i32 : i32
    %c0_i32_0 = arith.constant 0 : i32
    %c0_i32_1 = arith.constant 0 : i32
    return %c0_i32_0, %2 : i32, i32
  }
  func.func @transform_2(%arg0: i32, %arg1: i32) -> (i32, i32, i32) {
    %c0_i32 = arith.constant 0 : i32
    %c0_i32_0 = arith.constant 0 : i32
    %c0_i32_1 = arith.constant 0 : i32
    return %arg0, %c0_i32, %c0_i32_0 : i32, i32, i32
  }
  func.func @transform_3(%arg0: i32, %arg1: i32) -> (i32, i32, i32) {
    %c0_i32 = arith.constant 0 : i32
    %c0_i32_0 = arith.constant 0 : i32
    %c0_i32_1 = arith.constant 0 : i32
    return %arg0, %c0_i32, %c0_i32_0 : i32, i32, i32
  }
  func.func @transform_4(%arg0: i32, %arg1: i32) -> (i32, i32, i32) {
    %c0_i32 = arith.constant 0 : i32
    %c0_i32_0 = arith.constant 0 : i32
    %c0_i32_1 = arith.constant 0 : i32
    return %arg0, %c0_i32, %c0_i32_0 : i32, i32, i32
  }
}

</mosaic_0001>

<llo_original>
// kernel: f1_loss.1
$region0: #{f1_loss.1}
  #allocation0 [shape = 'u32[]', space=smem, size = 0x4, offset = 0x4, fixed_abs, tag = 'smem constant byte address 0x4 - core index']
  #allocation1 [shape = 'u32[144,128]{1,0:T(1,128)}', space=vmem, size = 0x12000, scoped, tag = 'internal scratch']
  %s0 = inlined_call_operand.vmem [shape: s32[1,8], index: 0, kind: input, shape index: {}]
  %s1 = inlined_call_operand.vmem [shape: f32[7,8], index: 1, kind: input, shape index: {}]
  %s2 = inlined_call_operand.vmem [shape: f32[1,7,1], index: 2, kind: output, shape index: {0}]
  %s3 = inlined_call_operand.vmem [shape: f32[1,7,1], index: 3, kind: output, shape index: {1}]
  %s4 = inlined_call_operand.vmem [shape: f32[1,7,1], index: 4, kind: output, shape index: {2}]
  %5 = xla_tuple %s2, %s3, %s4
  %s6 = sld [smem:[#allocation0]]
  $region46: #{f1_loss.1} parent=0
    _
  %s8 = ssub.s32 1, %s6
  %s9 = scalar_select 0, %s8, %s6
  // Predicated region
  $region2: #{f1_loss.1} parent=0 // pred_check
    _
  $region3: #{f1_loss.1} parent=0 // pred_check_branch
    %11 = sbr.rel (0) target = $region5
  $region4: #{f1_loss.1} parent=0 // pred_region
    %s12 = sadd.s32 0, 0
    %p13 = scmp.lt.s32.totalorder %s12, 0
    %s14 = scalar_select %p13, %s12, 0
    %p15 = scmp.lt.s32.totalorder %s14, 0
    %s16 = scalar_select %p15, %s14, 0
    %s17 = scalar_lea.vmem %s0, %s16
    %s18 = sadd.s32 0, 0
    %p19 = scmp.lt.s32.totalorder %s18, 0
    %s20 = scalar_select %p19, %s18, 0
  $region5: #{f1_loss.1} parent=0 // pred_fallthru
    _
  // Predicated region
  $region6: #{f1_loss.1} parent=0 // pred_check
    _
  $region7: #{f1_loss.1} parent=0 // pred_check_branch
    %22 = sbr.rel (0) target = $region9
  $region8: #{f1_loss.1} parent=0 // pred_region
    %s23 = sadd.s32 0, 0
    %p24 = scmp.lt.s32.totalorder %s23, 0
    %s25 = scalar_select %p24, %s23, 0
    %p26 = scmp.lt.s32.totalorder %s25, 0
    %s27 = scalar_select %p26, %s25, 0
    %s28 = smul.addr %s27, 8
    %s29 = scalar_lea.vmem %s1, %s28
    %s30 = sadd.s32 0, 0
    %p31 = scmp.lt.s32.totalorder %s30, 0
    %s32 = scalar_select %p31, %s30, 0
  $region9: #{f1_loss.1} parent=0 // pred_fallthru
    _
  %s33 = sadd.s32 0, 0
  %p34 = scmp.lt.s32.totalorder %s33, 0
  %s35 = scalar_select %p34, %s33, 0
  %p36 = scmp.lt.s32.totalorder %s35, 0
  %s37 = scalar_select %p36, %s35, 0
  %s38 = scalar_lea.vmem %s0, %s37
  %s39 = sadd.s32 0, 0
  %p40 = scmp.lt.s32.totalorder %s39, 0
  %s41 = scalar_select %p40, %s39, 0
  %p42 = scmp.lt.s32.totalorder %s41, 0
  %s43 = scalar_select %p42, %s41, 0
  %s44 = smul.addr %s43, 8
  %s45 = scalar_lea.vmem %s1, %s44
  %s46 = sadd.s32 0, 0
  %p47 = scmp.lt.s32.totalorder %s46, 0
  %s48 = scalar_select %p47, %s46, 0
  %p49 = scmp.lt.s32.totalorder %s48, 0
  %s50 = scalar_select %p49, %s48, 0
  %s51 = scalar_lea.vmem %s0, %s50
  %s52 = sadd.s32 0, 0
  %p53 = scmp.lt.s32.totalorder %s52, 0
  %s54 = scalar_select %p53, %s52, 0
  %s55 = sadd.s32 0, 0
  %p56 = scmp.lt.s32.totalorder %s55, 0
  %s57 = scalar_select %p56, %s55, 0
  %p58 = scmp.lt.s32.totalorder %s57, 0
  %s59 = scalar_select %p58, %s57, 0
  %s60 = smul.addr %s59, 8
  %s61 = scalar_lea.vmem %s1, %s60
  %s62 = sadd.s32 0, 0
  %p63 = scmp.lt.s32.totalorder %s62, 0
  %s64 = scalar_select %p63, %s62, 0
  %p65 = scmp.eq.s32.totalorder 0, 0
  // Predicated region
  $region10: #{f1_loss.1} parent=0 // pred_check
    %p66 = pneg %p65
  $region11: #{f1_loss.1} parent=0 // pred_check_branch
    %68 = sbr.rel (%p66) target = $region13
  $region12: #{f1_loss.1} parent=0 // pred_region
    %vm69 = vcmask 6144
    %70 = vst.msk [vmem:[%s2] sm:$0x7f] %vm69, 0.0
    %71 = vst.msk [vmem:[%s3] sm:$0x7f] %vm69, 0.0
    %72 = vst.msk [vmem:[%s4] sm:$0x7f] %vm69, 0.0
  $region13: #{f1_loss.1} parent=0 // pred_fallthru
    _
  %s73 = sadd.s32 0, 0
  %s74 = smul.u32 %s73, 8
  %v75 = vld [vmem:[%s61] sm:$0x7f]
  %v76 = vld [vmem:[%s51] sm:$0x1]
  %s77 = sadd.s32 %s73, 1
  %s78 = smul.u32 %s77, 8
  %p79 = scmp.le.s32.totalorder %s78, 8
  // Predicated region
  $region14: #{f1_loss.1} parent=0 // pred_check
    %p80 = pneg %p79
  $region15: #{f1_loss.1} parent=0 // pred_check_branch
    %82 = sbr.rel (%p80) target = $region17
  $region16: #{f1_loss.1} parent=0 // pred_region
    %v83 = vlaneseq
    %v84 = vshrl.u32 %v83, 7
    %v85 = vlaneseq
    %v86 = vshrl.u32 %v85, 7
    %v87 = vsub.s32 0, %v86
    %v88 = vrot.slane %v76, %v87
    %vm89 = vcmp.eq.s32.totalorder %v88, %v84
    %v90 = vsel %vm89, 1, 0
    %v91 = vcvt.s32.f32 %v90
    %vm92 = vcmask 63488
    %v93 = vsel %vm92, %v75, -inf
    %v94 = vrot.slane %v93, 4
    %v95 = vmax.f32 %v93, %v94
    %v96 = vrot.slane %v95, 2
    %v97 = vmax.f32 %v95, %v96
    %v98 = vrot.slane %v97, 1
    %v99 = vmax.f32 %v97, %v98
    %v100 = vsub.f32 %v75, %v99
    %v101 = vmul.f32 %v100, 1.442695
    %v102 = vpow.pop %v101
    %v103 = vsel %vm92, %v102, 0.0
    %v104 = vrot.slane %v103, 4
    %v105 = vadd.f32 %v103, %v104
    %v106 = vrot.slane %v105, 2
    %v107 = vadd.f32 %v105, %v106
    %v108 = vrot.slane %v107, 1
    %v109 = vadd.f32 %v107, %v108
    %v110 = vrcp.pop %v109
    %v111 = vmul.f32 %v109, %v110
    %v112 = vsub.f32 2.0, %v111
    %v113 = vmul.f32 %v110, %v112
    %v114 = vmul.f32 %v102, %v113
    %v115 = vld [vmem:[%s2] sm:$0x7f]
    %v116 = vmul.f32 %v91, %v114
    %v117 = vsel %vm92, %v116, 0.0
    %118 = vadd.xlane.f32.xlu0 %v117
    %v119 = vpop.xlane.xlu0 %118
    %v120 = vadd.f32 %v115, %v119
    %vm121 = vcmask 6144
    %122 = vst.msk [vmem:[%s2] sm:$0x7f] %vm121, %v120
    %v123 = vld [vmem:[%s3] sm:$0x7f]
    %v124 = vsel %vm92, %v114, 0.0
    %125 = vadd.xlane.f32.xlu0 %v124
    %v126 = vpop.xlane.xlu0 %125
    %v127 = vadd.f32 %v123, %v126
    %128 = vst.msk [vmem:[%s3] sm:$0x7f] %vm121, %v127
    %v129 = vld [vmem:[%s4] sm:$0x7f]
    %v130 = vsel %vm92, %v91, 0.0
    %131 = vadd.xlane.f32.xlu0 %v130
    %v132 = vpop.xlane.xlu0 %131
    %v133 = vadd.f32 %v129, %v132
    %134 = vst.msk [vmem:[%s4] sm:$0x7f] %vm121, %v133
  $region17: #{f1_loss.1} parent=0 // pred_fallthru
    _
  %p135 = scmp.gt.s32.totalorder %s78, 8
  // Predicated region
  $region18: #{f1_loss.1} parent=0 // pred_check
    %p136 = pneg %p135
  $region19: #{f1_loss.1} parent=0 // pred_check_branch
    %138 = sbr.rel (%p136) target = $region21
  $region20: #{f1_loss.1} parent=0 // pred_region
    %v139 = vlaneseq
    %v140 = vand.u32 %v139, 127
    %v141 = vstv %s74
    %v142 = vadd.s32 %v141, %v140
    %vm143 = vcmp.lt.s32.totalorder %v142, 8
    %v144 = vsel %vm143, %v75, 0.0
    %v145 = vlaneseq
    %v146 = vshrl.u32 %v145, 7
    %v147 = vlaneseq
    %v148 = vshrl.u32 %v147, 7
    %v149 = vsub.s32 0, %v148
    %v150 = vrot.slane %v76, %v149
    %vm151 = vcmp.eq.s32.totalorder %v150, %v146
    %vm152 = vmand %vm151, %vm143
    %v153 = vsel %vm152, 1, 0
    %v154 = vcvt.s32.f32 %v153
    %vm155 = vcmask 63488
    %v156 = vsel %vm155, %v144, -inf
    %v157 = vrot.slane %v156, 4
    %v158 = vmax.f32 %v156, %v157
    %v159 = vrot.slane %v158, 2
    %v160 = vmax.f32 %v158, %v159
    %v161 = vrot.slane %v160, 1
    %v162 = vmax.f32 %v160, %v161
    %v163 = vsub.f32 %v144, %v162
    %v164 = vmul.f32 %v163, 1.442695
    %v165 = vpow.pop %v164
    %v166 = vsel %vm155, %v165, 0.0
    %v167 = vrot.slane %v166, 4
    %v168 = vadd.f32 %v166, %v167
    %v169 = vrot.slane %v168, 2
    %v170 = vadd.f32 %v168, %v169
    %v171 = vrot.slane %v170, 1
    %v172 = vadd.f32 %v170, %v171
    %v173 = vrcp.pop %v172
    %v174 = vmul.f32 %v172, %v173
    %v175 = vsub.f32 2.0, %v174
    %v176 = vmul.f32 %v173, %v175
    %v177 = vmul.f32 %v165, %v176
    %v178 = vsel %vm143, %v177, 0.0
    %v179 = vld [vmem:[%s2] sm:$0x7f]
    %v180 = vmul.f32 %v154, %v178
    %v181 = vsel %vm155, %v180, 0.0
    %182 = vadd.xlane.f32.xlu0 %v181
    %v183 = vpop.xlane.xlu0 %182
    %v184 = vadd.f32 %v179, %v183
    %vm185 = vcmask 6144
    %186 = vst.msk [vmem:[%s2] sm:$0x7f] %vm185, %v184
    %v187 = vld [vmem:[%s3] sm:$0x7f]
    %v188 = vsel %vm155, %v178, 0.0
    %189 = vadd.xlane.f32.xlu0 %v188
    %v190 = vpop.xlane.xlu0 %189
    %v191 = vadd.f32 %v187, %v190
    %192 = vst.msk [vmem:[%s3] sm:$0x7f] %vm185, %v191
    %v193 = vld [vmem:[%s4] sm:$0x7f]
    %v194 = vsel %vm155, %v154, 0.0
    %195 = vadd.xlane.f32.xlu0 %v194
    %v196 = vpop.xlane.xlu0 %195
    %v197 = vadd.f32 %v193, %v196
    %198 = vst.msk [vmem:[%s4] sm:$0x7f] %vm185, %v197
  $region21: #{f1_loss.1} parent=0 // pred_fallthru
    _
  // Predicated region
  $region22: #{f1_loss.1} parent=0 // pred_check
    _
  $region23: #{f1_loss.1} parent=0 // pred_check_branch
    %200 = sbr.rel (0) target = $region25
  $region24: #{f1_loss.1} parent=0 // pred_region
    _
  $region25: #{f1_loss.1} parent=0 // pred_fallthru
    _
  // Predicated region
  $region26: #{f1_loss.1} parent=0 // pred_check
    _
  $region27: #{f1_loss.1} parent=0 // pred_check_branch
    %202 = sbr.rel (0) target = $region29
  $region28: #{f1_loss.1} parent=0 // pred_region
    _
  $region29: #{f1_loss.1} parent=0 // pred_fallthru
    _
  // Predicated region
  $region30: #{f1_loss.1} parent=0 // pred_check
    _
  $region31: #{f1_loss.1} parent=0 // pred_check_branch
    %204 = sbr.rel (0) target = $region33
  $region32: #{f1_loss.1} parent=0 // pred_region
    _
  $region33: #{f1_loss.1} parent=0 // pred_fallthru
    _
  // Predicated region
  $region34: #{f1_loss.1} parent=0 // pred_check
    _
  $region35: #{f1_loss.1} parent=0 // pred_check_branch
    %206 = sbr.rel (0) target = $region37
  $region36: #{f1_loss.1} parent=0 // pred_region
    _
  $region37: #{f1_loss.1} parent=0 // pred_fallthru
    _
  // Predicated region
  $region38: #{f1_loss.1} parent=0 // pred_check
    _
  $region39: #{f1_loss.1} parent=0 // pred_check_branch
    %208 = sbr.rel (0) target = $region41
  $region40: #{f1_loss.1} parent=0 // pred_region
    _
  $region41: #{f1_loss.1} parent=0 // pred_fallthru
    _
  // Predicated region
  $region42: #{f1_loss.1} parent=0 // pred_check
    _
  $region43: #{f1_loss.1} parent=0 // pred_check_branch
    %210 = sbr.rel (0) target = $region45
  $region44: #{f1_loss.1} parent=0 // pred_region
    _
  $region45: #{f1_loss.1} parent=0 // pred_fallthru
    _

</llo_original>
